<compile_context>
chip_gen: v5e
topology: v5e:2x2
jax: 0.10.0
libtpu: 0.0.40
codegen_flags: <defaults>
</compile_context>

<pallas_src>
import functools

import jax
import jax.numpy as jnp
from jax.experimental import pallas as pl
from jax.experimental.pallas import tpu as pltpu


def _ceil_div(a, b):
    return -(-a // b)


def _tpu_budgets():
    """Returns (generation, vmem_limit_bytes, per-step tile budget bytes)."""
    kind = ""
    try:
        kind = jax.devices()[0].device_kind.lower()
    except Exception:
        pass
    mib = 1024 * 1024
    if "v7" in kind or "7x" in kind:
        # 64 MiB VMEM per TensorCore -> leave headroom for compiler scratch.
        return "v7x", 48 * mib, 32 * mib
    if "v6" in kind:
        return "v6e", 96 * mib, 48 * mib
    if "v5" in kind:
        return "v5e", 64 * mib, 40 * mib
    return "unknown", 48 * mib, 24 * mib


def _attention_block_kernel(x_ref, w1_ref, b1_ref, w2_ref, b2_ref, o_ref):
    # x_ref/o_ref: (nb, C, THW)  channels on sublanes, pixels on lanes
    # w1_ref: (C8, C)  torch layout [out, in], used directly as W1 @ x
    # b1_ref: (C8, 1)  f32
    # w2_ref: (C, C8)  torch layout [out, in], used directly as W2 @ h
    # b2_ref: (C, 1)   f32
    w1 = w1_ref[...]
    w2 = w2_ref[...]
    b1 = b1_ref[...]
    b2 = b2_ref[...]
    nb = x_ref.shape[0]
    for i in range(nb):  # static, small unrolled batch-block loop
        x = x_ref[i]
        # conv1 (1x1) + bias + ReLU — native-dtype matmul, f32 accumulation.
        h = jnp.dot(w1, x, preferred_element_type=jnp.float32)
        h = jnp.maximum(h + b1, 0.0).astype(x.dtype)
        # conv2 (1x1) + bias + sigmoid — gate cast to x dtype before the
        # multiply (halves the biggest f32 intermediate for bf16 inputs).
        a = jnp.dot(w2, h, preferred_element_type=jnp.float32)
        a = jax.nn.sigmoid(a + b2).astype(x.dtype)
        o_ref[i] = (x * a).astype(o_ref.dtype)


@functools.partial(jax.jit, static_argnames=("nb", "thw", "vmem_limit"))
def _attention_block_call(x3, w1, b1_k, w2, b2_k, *, nb, thw, vmem_limit):
    N, C, HW = x3.shape
    C8 = w1.shape[0]
    grid = (pl.cdiv(N, nb), pl.cdiv(HW, thw))  # ragged tails -> masked writes
    return pl.pallas_call(
        _attention_block_kernel,
        out_shape=jax.ShapeDtypeStruct((N, C, HW), x3.dtype),
        grid_spec=pltpu.PrefetchScalarGridSpec(
            num_scalar_prefetch=0,
            grid=grid,
            in_specs=[
                pl.BlockSpec((nb, C, thw), lambda n, t: (n, 0, t)),
                pl.BlockSpec((C8, C), lambda n, t: (0, 0)),
                pl.BlockSpec((C8, 1), lambda n, t: (0, 0)),
                pl.BlockSpec((C, C8), lambda n, t: (0, 0)),
                pl.BlockSpec((C, 1), lambda n, t: (0, 0)),
            ],
            out_specs=pl.BlockSpec((nb, C, thw), lambda n, t: (n, 0, t)),
        ),
        compiler_params=pltpu.CompilerParams(
            dimension_semantics=("parallel", "parallel"),
            vmem_limit_bytes=vmem_limit,
        ),
    )(x3, w1, b1_k, w2, b2_k)


def attention_block(x_nchw, w1, b1, w2, b2, *, thw=None):
    """x_nchw: (N, C, H, W); w1: (C//8, C) torch [out, in]; b1: (C//8,);
    w2: (C, C//8); b2: (C,). Returns (N, C, H, W)."""
    N, C, H, W = x_nchw.shape
    C8 = w1.shape[0]
    HW = H * W
    itemsize = x_nchw.dtype.itemsize
    gen, vmem_limit, tile_budget = _tpu_budgets()

    # VMEM bytes per lane column of one batch row of the block:
    #   double-buffered in + out tiles at native dtype (4*itemsize) plus the
    #   f32 sigmoid gate `a` (~4 B) and the small `h` / compiler scratch (~2 B).
    per_col = C * (4 * itemsize + 6)

    hw_rounded = _ceil_div(HW, 128) * 128
    max_thw = max(128, (tile_budget // per_col) // 128 * 128)
    if thw is None:
        thw_req = max_thw
    else:
        thw_req = max(128, (int(thw) // 128) * 128)  # force multiple of 128
    thw_eff = min(thw_req, max_thw, hw_rounded)

    # Batch blocking: when the whole image fits in one lane tile but is small,
    # pack several batch images per grid step to keep per-step HBM traffic up.
    nb = 1
    if thw_eff >= hw_rounded:
        target_bytes = 4 * 1024 * 1024  # aim for >= ~4 MiB of x per grid step
        nb_target = _ceil_div(target_bytes, C * HW * itemsize)
        nb_budget = max(1, tile_budget // (per_col * hw_rounded))
        nb = int(max(1, min(N, nb_target, nb_budget)))

    # v7x megacore: keep enough grid steps to feed both TensorCores.
    if gen == "v7x":
        def _steps(nb_, thw_):
            return _ceil_div(N, nb_) * _ceil_div(HW, thw_)
        while nb > 1 and _steps(nb, thw_eff) < 4:
            nb = max(1, nb // 2)
        while thw_eff > 128 and _steps(nb, thw_eff) < 4:
            new_thw = max(128, (thw_eff // 2) // 128 * 128)
            if new_thw == thw_eff:
                break
            thw_eff = new_thw

    # Free view NCHW -> (N, C, H*W); channels on sublanes, pixels on lanes.
    x3 = x_nchw.reshape(N, C, HW)
    # Biases pre-cast once to f32 (accumulators are f32); weights stay native.
    b1_k = b1.reshape(C8, 1).astype(jnp.float32)
    b2_k = b2.reshape(C, 1).astype(jnp.float32)

    out3 = _attention_block_call(
        x3, w1, b1_k, w2, b2_k, nb=nb, thw=thw_eff, vmem_limit=vmem_limit
    )
    return out3.reshape(N, C, H, W)


def _reference(x_nchw, w1, b1, w2, b2):
    # pure-JAX f32 reference mirroring the PyTorch module (NCHW, 1x1 convs).
    N, C, H, W = x_nchw.shape
    x = x_nchw.reshape(N, C, H * W).astype(jnp.float32)
    w1f = w1.astype(jnp.float32)
    w2f = w2.astype(jnp.float32)
    h = jnp.maximum(
        jnp.einsum("oc,ncp->nop", w1f, x) + b1.astype(jnp.float32)[None, :, None], 0.0
    )
    a = jax.nn.sigmoid(
        jnp.einsum("oc,ncp->nop", w2f, h) + b2.astype(jnp.float32)[None, :, None]
    )
    return (x * a).reshape(N, C, H, W)


if __name__ == "__main__":
    def run_case(name, dtype, N, C, H, W, atol, rtol):
        C8 = C // 8
        key = jax.random.PRNGKey(0)
        kx, k1, kb1, k2, kb2 = jax.random.split(key, 5)
        x = jax.random.normal(kx, (N, C, H, W), dtype=jnp.float32).astype(dtype)
        bound1 = 1.0 / (C ** 0.5)
        w1 = jax.random.uniform(k1, (C8, C), jnp.float32, -bound1, bound1).astype(dtype)
        b1 = jax.random.uniform(kb1, (C8,), jnp.float32, -bound1, bound1)
        bound2 = 1.0 / (C8 ** 0.5)
        w2 = jax.random.uniform(k2, (C, C8), jnp.float32, -bound2, bound2).astype(dtype)
        b2 = jax.random.uniform(kb2, (C,), jnp.float32, -bound2, bound2)

        out = jax.block_until_ready(attention_block(x, w1, b1, w2, b2))
        ref = _reference(x, w1, b1, w2, b2)
        assert out.shape == (N, C, H, W), name
        assert jnp.allclose(out.astype(jnp.float32), ref, atol=atol, rtol=rtol), (
            f"mismatch vs reference: {name}"
        )

    # f32, full 256-pixel lane tile (original sanity case)
    run_case("f32_c32", jnp.float32, 2, 32, 16, 16, 1e-5, 1e-5)
    # bf16, H*W=120 not a multiple of 128 (masked lane tail + mixed precision)
    run_case("bf16_ragged", jnp.bfloat16, 2, 32, 10, 12, 5e-2, 5e-2)
    # tiny image, several batch elements packed per grid step (nb > 1 path)
    run_case("f32_batchblock", jnp.float32, 5, 16, 8, 8, 1e-5, 1e-5)

    print("KERNEL_OK")
</pallas_src>

<mosaic_0001>
module attributes {stable_mosaic.version = 11 : i64} {
  func.func @_attention_block_kernel(%arg0: i32, %arg1: i32, %arg2: memref<2x32x256xf32, #tpu.memory_space<vmem>>, %arg3: memref<4x32xf32, #tpu.memory_space<vmem>>, %arg4: memref<4x1xf32, #tpu.memory_space<vmem>>, %arg5: memref<32x4xf32, #tpu.memory_space<vmem>>, %arg6: memref<32x1xf32, #tpu.memory_space<vmem>>, %arg7: memref<2x32x256xf32, #tpu.memory_space<vmem>>) attributes {dimension_semantics = [#tpu.dimension_semantics<parallel>, #tpu.dimension_semantics<parallel>], iteration_bounds = array<i64: 1, 1>, scalar_prefetch = 0 : i64, scratch_operands = 0 : i64, tpu.core_type = #tpu.core_type<tc>, window_params = [{transform_indices = @transform_0, window_bounds = array<i64: 2, 32, 256>}, {pipeline_mode = #tpu.pipeline_mode<synchronous>, transform_indices = @transform_1, window_bounds = array<i64: 4, 32>}, {pipeline_mode = #tpu.pipeline_mode<synchronous>, transform_indices = @transform_2, window_bounds = array<i64: 4, 1>}, {pipeline_mode = #tpu.pipeline_mode<synchronous>, transform_indices = @transform_3, window_bounds = array<i64: 32, 4>}, {pipeline_mode = #tpu.pipeline_mode<synchronous>, transform_indices = @transform_4, window_bounds = array<i64: 32, 1>}, {transform_indices = @transform_5, window_bounds = array<i64: 2, 32, 256>}]} {
    %c0 = arith.constant 0 : index
    %c0_0 = arith.constant 0 : index
    %0 = vector.load %arg3[%c0, %c0_0] : memref<4x32xf32, #tpu.memory_space<vmem>>, vector<4x32xf32>
    %c0_1 = arith.constant 0 : index
    %c0_2 = arith.constant 0 : index
    %1 = vector.load %arg5[%c0_1, %c0_2] : memref<32x4xf32, #tpu.memory_space<vmem>>, vector<32x4xf32>
    %c0_3 = arith.constant 0 : index
    %c0_4 = arith.constant 0 : index
    %2 = vector.load %arg4[%c0_3, %c0_4] : memref<4x1xf32, #tpu.memory_space<vmem>>, vector<4x1xf32>
    %c0_5 = arith.constant 0 : index
    %c0_6 = arith.constant 0 : index
    %3 = vector.load %arg6[%c0_5, %c0_6] : memref<32x1xf32, #tpu.memory_space<vmem>>, vector<32x1xf32>
    %c0_7 = arith.constant 0 : index
    %c0_8 = arith.constant 0 : index
    %c0_9 = arith.constant 0 : index
    %4 = vector.load %arg2[%c0_7, %c0_8, %c0_9] : memref<2x32x256xf32, #tpu.memory_space<vmem>>, vector<1x32x256xf32>
    %5 = vector.shape_cast %4 : vector<1x32x256xf32> to vector<32x256xf32>
    %cst = arith.constant dense<0.000000e+00> : vector<4x256xf32>
    %6 = tpu.matmul %0, %5, %cst {dimension_numbers = #tpu.dot_dimension_numbers<[1], [0], [0], [1], [0, 0, 1, 1], [], []>} : vector<4x32xf32>, vector<32x256xf32>, vector<4x256xf32> -> vector<4x256xf32>
    %7 = vector.broadcast %2 : vector<4x1xf32> to vector<4x256xf32>
    %8 = arith.addf %6, %7 : vector<4x256xf32>
    %cst_10 = arith.constant 0.000000e+00 : f32
    %9 = vector.broadcast %cst_10 : f32 to vector<4x256xf32>
    %10 = arith.maximumf %8, %9 : vector<4x256xf32>
    %cst_11 = arith.constant dense<0.000000e+00> : vector<32x256xf32>
    %11 = tpu.matmul %1, %10, %cst_11 {dimension_numbers = #tpu.dot_dimension_numbers<[1], [0], [0], [1], [0, 0, 1, 1], [], []>} : vector<32x4xf32>, vector<4x256xf32>, vector<32x256xf32> -> vector<32x256xf32>
    %12 = vector.broadcast %3 : vector<32x1xf32> to vector<32x256xf32>
    %13 = arith.addf %11, %12 : vector<32x256xf32>
    %14 = arith.negf %13 : vector<32x256xf32>
    %15 = math.exp %14 : vector<32x256xf32>
    %cst_12 = arith.constant 1.000000e+00 : f32
    %16 = vector.broadcast %cst_12 : f32 to vector<32x256xf32>
    %17 = arith.addf %16, %15 : vector<32x256xf32>
    %18 = arith.divf %16, %17 : vector<32x256xf32>
    %19 = arith.mulf %5, %18 : vector<32x256xf32>
    %c0_13 = arith.constant 0 : index
    %c0_14 = arith.constant 0 : index
    %c0_15 = arith.constant 0 : index
    %20 = vector.load %arg7[%c0_13, %c0_14, %c0_15] : memref<2x32x256xf32, #tpu.memory_space<vmem>>, vector<1x32x256xf32>
    %21 = vector.shape_cast %20 : vector<1x32x256xf32> to vector<32x256xf32>
    %22 = vector.shape_cast %19 : vector<32x256xf32> to vector<1x32x256xf32>
    tpu.vector_store %arg7[%c0_13, %c0_14, %c0_15], %22 {strides = array<i32>} : memref<2x32x256xf32, #tpu.memory_space<vmem>>, vector<1x32x256xf32>,
    %c1 = arith.constant 1 : index
    %c0_16 = arith.constant 0 : index
    %c0_17 = arith.constant 0 : index
    %23 = vector.load %arg2[%c1, %c0_16, %c0_17] : memref<2x32x256xf32, #tpu.memory_space<vmem>>, vector<1x32x256xf32>
    %24 = vector.shape_cast %23 : vector<1x32x256xf32> to vector<32x256xf32>
    %cst_18 = arith.constant dense<0.000000e+00> : vector<4x256xf32>
    %25 = tpu.matmul %0, %24, %cst_18 {dimension_numbers = #tpu.dot_dimension_numbers<[1], [0], [0], [1], [0, 0, 1, 1], [], []>} : vector<4x32xf32>, vector<32x256xf32>, vector<4x256xf32> -> vector<4x256xf32>
    %26 = vector.broadcast %2 : vector<4x1xf32> to vector<4x256xf32>
    %27 = arith.addf %25, %26 : vector<4x256xf32>
    %cst_19 = arith.constant 0.000000e+00 : f32
    %28 = vector.broadcast %cst_19 : f32 to vector<4x256xf32>
    %29 = arith.maximumf %27, %28 : vector<4x256xf32>
    %cst_20 = arith.constant dense<0.000000e+00> : vector<32x256xf32>
    %30 = tpu.matmul %1, %29, %cst_20 {dimension_numbers = #tpu.dot_dimension_numbers<[1], [0], [0], [1], [0, 0, 1, 1], [], []>} : vector<32x4xf32>, vector<4x256xf32>, vector<32x256xf32> -> vector<32x256xf32>
    %31 = vector.broadcast %3 : vector<32x1xf32> to vector<32x256xf32>
    %32 = arith.addf %30, %31 : vector<32x256xf32>
    %33 = arith.negf %32 : vector<32x256xf32>
    %34 = math.exp %33 : vector<32x256xf32>
    %cst_21 = arith.constant 1.000000e+00 : f32
    %35 = vector.broadcast %cst_21 : f32 to vector<32x256xf32>
    %36 = arith.addf %35, %34 : vector<32x256xf32>
    %37 = arith.divf %35, %36 : vector<32x256xf32>
    %38 = arith.mulf %24, %37 : vector<32x256xf32>
    %c1_22 = arith.constant 1 : index
    %c0_23 = arith.constant 0 : index
    %c0_24 = arith.constant 0 : index
    %39 = vector.load %arg7[%c1_22, %c0_23, %c0_24] : memref<2x32x256xf32, #tpu.memory_space<vmem>>, vector<1x32x256xf32>
    %40 = vector.shape_cast %39 : vector<1x32x256xf32> to vector<32x256xf32>
    %41 = vector.shape_cast %38 : vector<32x256xf32> to vector<1x32x256xf32>
    tpu.vector_store %arg7[%c1_22, %c0_23, %c0_24], %41 {strides = array<i32>} : memref<2x32x256xf32, #tpu.memory_space<vmem>>, vector<1x32x256xf32>,
    return
  }
  func.func @transform_0(%arg0: i32, %arg1: i32) -> (i32, i32, i32) {
    %c0_i32 = arith.constant 0 : i32
    %c0_i32_0 = arith.constant 0 : i32
    return %arg0, %c0_i32, %arg1 : i32, i32, i32
  }
  func.func @transform_1(%arg0: i32, %arg1: i32) -> (i32, i32) {
    %c0_i32 = arith.constant 0 : i32
    %c0_i32_0 = arith.constant 0 : i32
    %c0_i32_1 = arith.constant 0 : i32
    return %c0_i32, %c0_i32_0 : i32, i32
  }
  func.func @transform_2(%arg0: i32, %arg1: i32) -> (i32, i32) {
    %c0_i32 = arith.constant 0 : i32
    %c0_i32_0 = arith.constant 0 : i32
    %c0_i32_1 = arith.constant 0 : i32
    return %c0_i32, %c0_i32_0 : i32, i32
  }
  func.func @transform_3(%arg0: i32, %arg1: i32) -> (i32, i32) {
    %c0_i32 = arith.constant 0 : i32
    %c0_i32_0 = arith.constant 0 : i32
    %c0_i32_1 = arith.constant 0 : i32
    return %c0_i32, %c0_i32_0 : i32, i32
  }
  func.func @transform_4(%arg0: i32, %arg1: i32) -> (i32, i32) {
    %c0_i32 = arith.constant 0 : i32
    %c0_i32_0 = arith.constant 0 : i32
    %c0_i32_1 = arith.constant 0 : i32
    return %c0_i32, %c0_i32_0 : i32, i32
  }
  func.func @transform_5(%arg0: i32, %arg1: i32) -> (i32, i32, i32) {
    %c0_i32 = arith.constant 0 : i32
    %c0_i32_0 = arith.constant 0 : i32
    return %arg0, %c0_i32, %arg1 : i32, i32, i32
  }
}

</mosaic_0001>

<llo_original>
// kernel: _attention_block_call.1
$region0: #{_attention_block_call.1}
  #allocation0 [shape = 'u32[]', space=smem, size = 0x4, offset = 0x4, fixed_abs, tag = 'smem constant byte address 0x4 - core index']
  #allocation1 [shape = 'u32[72,128]{1,0:T(1,128)}', space=vmem, size = 0x9000, scoped, tag = 'internal scratch']
  %s0 = inlined_call_operand.hbm [shape: f32[2,32,256], index: 0, kind: input, shape index: {}]
  %s1 = inlined_call_operand.vmem [shape: f32[4,32], index: 1, kind: input, shape index: {}]
  %s2 = inlined_call_operand.vmem [shape: f32[4,1], index: 2, kind: input, shape index: {}]
  %s3 = inlined_call_operand.vmem [shape: f32[32,4], index: 3, kind: input, shape index: {}]
  %s4 = inlined_call_operand.vmem [shape: f32[32,1], index: 4, kind: input, shape index: {}]
  %s5 = inlined_call_operand.hbm [shape: f32[2,32,256], index: 5, kind: output, shape index: {}]
  %s6 = sld [smem:[#allocation0]]
  $region34: #{_attention_block_call.1} parent=0
    _
  %s8 = ssub.s32 1, %s6
  %s9 = scalar_select 0, %s8, %s6
  $region1: #{_attention_block_call.1} parent=0
    #allocation2 [shape = 'u8[65536]{0}', space=vmem, size = 0x10000, scoped, tag = 'input window, operand 0, single buffered']
    #allocation3 [shape = 's32[1]{0}', space=sflag, size = 0x4, scoped, tag = 'scoped memory for _attention_block_call.1']
    #allocation4 [shape = 's32[1]{0}', space=sflag, size = 0x4, scoped, tag = 'scoped memory for _attention_block_call.1']
    #allocation5 [shape = 'u8[65536]{0}', space=vmem, size = 0x10000, scoped, tag = 'output window, operand 0, single buffered']
    %10 = vsyncpa [#allocation3], 0
    %11 = vsyncpa [#allocation4], 0
    // Predicated region
    $region2: #{_attention_block_call.1} parent=1 // pred_check
      _
    $region3: #{_attention_block_call.1} parent=1 // pred_check_branch
      %13 = sbr.rel (0) target = $region5
    $region4: #{_attention_block_call.1} parent=1 // pred_region
      %15 = vsyncadd [#allocation3], 0
      %s16 = sshll.u32 %s0, 4
      %s17 = int_to_ptr.hbm [resolvable:$true] %s16
      %s18 = sshll.u32 [#allocation2], 4
      %s19 = int_to_ptr.vmem [resolvable:$true] %s18
      %24 = dma.hbm_to_vmem [thread:$0]  %s17, 2048, %s19, [#allocation3], 256, 256, 16
    $region5: #{_attention_block_call.1} parent=1 // pred_fallthru
      _
    // Predicated region
    $region6: #{_attention_block_call.1} parent=1 // pred_check
      _
    $region7: #{_attention_block_call.1} parent=1 // pred_check_branch
      %26 = sbr.rel (0) target = $region9
    $region8: #{_attention_block_call.1} parent=1 // pred_region
      _
    $region9: #{_attention_block_call.1} parent=1 // pred_fallthru
      _
    // Predicated region
    $region10: #{_attention_block_call.1} parent=1 // pred_check
      _
    $region11: #{_attention_block_call.1} parent=1 // pred_check_branch
      %28 = sbr.rel (0) target = $region13
    $region12: #{_attention_block_call.1} parent=1 // pred_region
      _
    $region13: #{_attention_block_call.1} parent=1 // pred_fallthru
      _
    // Predicated region
    $region14: #{_attention_block_call.1} parent=1 // pred_check
      _
    $region15: #{_attention_block_call.1} parent=1 // pred_check_branch
      %30 = sbr.rel (0) target = $region17
    $region16: #{_attention_block_call.1} parent=1 // pred_region
      _
    $region17: #{_attention_block_call.1} parent=1 // pred_fallthru
      _
    // Predicated region
    $region18: #{_attention_block_call.1} parent=1 // pred_check
      _
    $region19: #{_attention_block_call.1} parent=1 // pred_check_branch
      %32 = sbr.rel (0) target = $region21
    $region20: #{_attention_block_call.1} parent=1 // pred_region
      _
    $region21: #{_attention_block_call.1} parent=1 // pred_fallthru
      _
    // Predicated region
    $region22: #{_attention_block_call.1} parent=1 // pred_check
      _
    $region23: #{_attention_block_call.1} parent=1 // pred_check_branch
      %34 = sbr.rel (0) target = $region25
    $region24: #{_attention_block_call.1} parent=1 // pred_region
      %36 = dma.done [#allocation3], 2048
    $region25: #{_attention_block_call.1} parent=1 // pred_fallthru
      _
    %v37 = vld [vmem:[%s1] sm:$0xf]
    %v38 = vld [vmem:[%s3] sm:$0xff]
    %v39 = vld [vmem:[%s3 + $0x8] sm:$0xff]
    %v40 = vld [vmem:[%s3 + $0x10] sm:$0xff]
    %v41 = vld [vmem:[%s3 + $0x18] sm:$0xff]
    %v42 = vld [vmem:[%s2] sm:$0xf]
    %v43 = vld [vmem:[%s4] sm:$0xff]
    %v44 = vld [vmem:[%s4 + $0x8] sm:$0xff]
    %v45 = vld [vmem:[%s4 + $0x10] sm:$0xff]
    %v46 = vld [vmem:[%s4 + $0x18] sm:$0xff]
    %v47 = vld [vmem:[#allocation2] sm:$0xff]
    %v48 = vld [vmem:[#allocation2 + $0x8] sm:$0xff]
    %v49 = vld [vmem:[#allocation2 + $0x10] sm:$0xff]
    %v50 = vld [vmem:[#allocation2 + $0x18] sm:$0xff]
    %v51 = vld [vmem:[#allocation2 + $0x20] sm:$0xff]
    %v52 = vld [vmem:[#allocation2 + $0x28] sm:$0xff]
    %v53 = vld [vmem:[#allocation2 + $0x30] sm:$0xff]
    %v54 = vld [vmem:[#allocation2 + $0x38] sm:$0xff]
    %56 = vset.pattern.permute.xlu0 0
    %57 = vperm.xlu0 %56, %v42
    %v58 = vpop.permute.xlu0 %57
    %vm60 = vcmask 261120
    %v62 = vsel %vm60, %v37, 0
    %64 = vmatpush.msra.mxu0 0.0
    %65 = vmatpush.msra.mxu0 0.0
    %66 = vmatpush.msra.mxu0 0.0
    %67 = vmatpush.msra.mxu0 0.0
    %68 = vmatpush.msra.mxu0 0.0
    %69 = vmatpush.msra.mxu0 0.0
    %70 = vmatpush.msra.mxu0 0.0
    %71 = vmatpush.msra.mxu0 0.0
    %72 = vmatpush.msra.mxu0 0.0
    %73 = vmatpush.msra.mxu0 0.0
    %74 = vmatpush.msra.mxu0 0.0
    %75 = vmatpush.msra.mxu0 0.0
    %76 = vmatpush.msra.mxu0 %v53
    %77 = vmatpush.msra.mxu0 %v51
    %78 = vmatpush.msra.mxu0 %v49
    %79 = vmatpush.msra.mxu0 %v47
    %80 = vmatmul.f32.gmra.mxu0 %v62
    %v81 = vpop.f32.mrf.mxu0
    %v82 = vadd.f32 %v58, %v81
    %83 = vdwg.mxu0
    %84 = vmatpush.msra.mxu0 0.0
    %85 = vmatpush.msra.mxu0 0.0
    %86 = vmatpush.msra.mxu0 0.0
    %87 = vmatpush.msra.mxu0 0.0
    %88 = vmatpush.msra.mxu0 0.0
    %89 = vmatpush.msra.mxu0 0.0
    %90 = vmatpush.msra.mxu0 0.0
    %91 = vmatpush.msra.mxu0 0.0
    %92 = vmatpush.msra.mxu0 0.0
    %93 = vmatpush.msra.mxu0 0.0
    %94 = vmatpush.msra.mxu0 0.0
    %95 = vmatpush.msra.mxu0 0.0
    %96 = vmatpush.msra.mxu0 %v54
    %97 = vmatpush.msra.mxu0 %v52
    %98 = vmatpush.msra.mxu0 %v50
    %99 = vmatpush.msra.mxu0 %v48
    %100 = vmatmul.f32.gmra.mxu0 %v62
    %v101 = vpop.f32.mrf.mxu0
    %v102 = vadd.f32 %v58, %v101
    %103 = vdwg.mxu0
    %v104 = vmax.f32 %v82, 0.0
    %v105 = vmax.f32 %v102, 0.0
    %107 = vset.pattern.permute.xlu0 0
    %108 = vperm.xlu0 %107, %v43
    %v109 = vpop.permute.xlu0 %108
    %112 = vset.pattern.permute.xlu0 0
    %113 = vperm.xlu0 %112, %v44
    %v114 = vpop.permute.xlu0 %113
    %117 = vset.pattern.permute.xlu0 0
    %118 = vperm.xlu0 %117, %v45
    %v119 = vpop.permute.xlu0 %118
    %122 = vset.pattern.permute.xlu0 0
    %123 = vperm.xlu0 %122, %v46
    %v124 = vpop.permute.xlu0 %123
    %vm126 = vcmask 31744
    %v128 = vsel %vm126, %v38, 0
    %v131 = vsel %vm126, %v39, 0
    %v134 = vsel %vm126, %v40, 0
    %v137 = vsel %vm126, %v41, 0
    %vm139 = vcmask 1043456
    %v141 = vsel %vm139, %v104, 0
    %v144 = vsel %vm139, %v105, 0
    %146 = vmatpush.msra.mxu0 0.0
    %147 = vmatpush.msra.mxu0 0.0
    %148 = vmatpush.msra.mxu0 0.0
    %149 = vmatpush.msra.mxu0 0.0
    %150 = vmatpush.msra.mxu0 0.0
    %151 = vmatpush.msra.mxu0 0.0
    %152 = vmatpush.msra.mxu0 0.0
    %153 = vmatpush.msra.mxu0 0.0
    %154 = vmatpush.msra.mxu0 0.0
    %155 = vmatpush.msra.mxu0 0.0
    %156 = vmatpush.msra.mxu0 0.0
    %157 = vmatpush.msra.mxu0 0.0
    %158 = vmatpush.msra.mxu0 0.0
    %159 = vmatpush.msra.mxu0 0.0
    %160 = vmatpush.msra.mxu0 0.0
    %161 = vmatpush.msra.mxu0 %v141
    %162 = vmatmul.f32.gmra.mxu0 %v128
    %v163 = vpop.f32.mrf.mxu0
    %v164 = vadd.f32 %v109, %v163
    %165 = vmatmul.f32.gmra.mxu0 %v131
    %v166 = vpop.f32.mrf.mxu0
    %v167 = vadd.f32 %v114, %v166
    %168 = vmatmul.f32.gmra.mxu0 %v134
    %v169 = vpop.f32.mrf.mxu0
    %v170 = vadd.f32 %v119, %v169
    %171 = vmatmul.f32.gmra.mxu0 %v137
    %v172 = vpop.f32.mrf.mxu0
    %v173 = vadd.f32 %v124, %v172
    %174 = vdwg.mxu0
    %175 = vmatpush.msra.mxu0 0.0
    %176 = vmatpush.msra.mxu0 0.0
    %177 = vmatpush.msra.mxu0 0.0
    %178 = vmatpush.msra.mxu0 0.0
    %179 = vmatpush.msra.mxu0 0.0
    %180 = vmatpush.msra.mxu0 0.0
    %181 = vmatpush.msra.mxu0 0.0
    %182 = vmatpush.msra.mxu0 0.0
    %183 = vmatpush.msra.mxu0 0.0
    %184 = vmatpush.msra.mxu0 0.0
    %185 = vmatpush.msra.mxu0 0.0
    %186 = vmatpush.msra.mxu0 0.0
    %187 = vmatpush.msra.mxu0 0.0
    %188 = vmatpush.msra.mxu0 0.0
    %189 = vmatpush.msra.mxu0 0.0
    %190 = vmatpush.msra.mxu0 %v144
    %191 = vmatmul.f32.gmra.mxu0 %v128
    %v192 = vpop.f32.mrf.mxu0
    %v193 = vadd.f32 %v109, %v192
    %194 = vmatmul.f32.gmra.mxu0 %v131
    %v195 = vpop.f32.mrf.mxu0
    %v196 = vadd.f32 %v114, %v195
    %197 = vmatmul.f32.gmra.mxu0 %v134
    %v198 = vpop.f32.mrf.mxu0
    %v199 = vadd.f32 %v119, %v198
    %200 = vmatmul.f32.gmra.mxu0 %v137
    %v201 = vpop.f32.mrf.mxu0
    %v202 = vadd.f32 %v124, %v201
    %203 = vdwg.mxu0
    %v204 = vxor.u32 %v164, 2147483648
    %v205 = vxor.u32 %v193, 2147483648
    %v206 = vxor.u32 %v167, 2147483648
    %v207 = vxor.u32 %v196, 2147483648
    %v208 = vxor.u32 %v170, 2147483648
    %v209 = vxor.u32 %v199, 2147483648
    %v210 = vxor.u32 %v173, 2147483648
    %v211 = vxor.u32 %v202, 2147483648
    %v212 = vmul.f32 %v204, 1.442695
    %v213 = vpow.pop %v212
    %v214 = vmul.f32 %v205, 1.442695
    %v215 = vpow.pop %v214
    %v216 = vmul.f32 %v206, 1.442695
    %v217 = vpow.pop %v216
    %v218 = vmul.f32 %v207, 1.442695
    %v219 = vpow.pop %v218
    %v220 = vmul.f32 %v208, 1.442695
    %v221 = vpow.pop %v220
    %v222 = vmul.f32 %v209, 1.442695
    %v223 = vpow.pop %v222
    %v224 = vmul.f32 %v210, 1.442695
    %v225 = vpow.pop %v224
    %v226 = vmul.f32 %v211, 1.442695
    %v227 = vpow.pop %v226
    %v228 = vadd.f32 %v213, 1.0
    %v229 = vadd.f32 %v215, 1.0
    %v230 = vadd.f32 %v217, 1.0
    %v231 = vadd.f32 %v219, 1.0
    %v232 = vadd.f32 %v221, 1.0
    %v233 = vadd.f32 %v223, 1.0
    %v234 = vadd.f32 %v225, 1.0
    %v235 = vadd.f32 %v227, 1.0
    %v236 = vrcp.pop %v228
    %v237 = vmul.f32 %v228, %v236
    %v238 = vsub.f32 1.0, %v237
    %v239 = vmul.f32 %v236, %v238
    %v240 = vadd.f32 %v236, %v239
    %vm241 = vweird.f32 %v228
    %vm242 = vweird.f32 %v236
    %vm243 = vmor %vm241, %vm242
    %v244 = vsel %vm243, %v236, %v240
    %v245 = vand.u32 2147483647, %v228
    %vm246 = vcmp.eq.f32.partialorder %v245, 8.507059e+37
    %v247 = vand.u32 %v228, 2147483648
    %v248 = vor.u32 1.1754944e-38, %v247
    %v249 = vsel %vm246, %v248, %v244
    %v250 = vmul.f32 1.0, %v249
    %v251 = vrcp.pop %v229
    %v252 = vmul.f32 %v229, %v251
    %v253 = vsub.f32 1.0, %v252
    %v254 = vmul.f32 %v251, %v253
    %v255 = vadd.f32 %v251, %v254
    %vm256 = vweird.f32 %v229
    %vm257 = vweird.f32 %v251
    %vm258 = vmor %vm256, %vm257
    %v259 = vsel %vm258, %v251, %v255
    %v260 = vand.u32 2147483647, %v229
    %vm261 = vcmp.eq.f32.partialorder %v260, 8.507059e+37
    %v262 = vand.u32 %v229, 2147483648
    %v263 = vor.u32 1.1754944e-38, %v262
    %v264 = vsel %vm261, %v263, %v259
    %v265 = vmul.f32 1.0, %v264
    %v266 = vrcp.pop %v230
    %v267 = vmul.f32 %v230, %v266
    %v268 = vsub.f32 1.0, %v267
    %v269 = vmul.f32 %v266, %v268
    %v270 = vadd.f32 %v266, %v269
    %vm271 = vweird.f32 %v230
    %vm272 = vweird.f32 %v266
    %vm273 = vmor %vm271, %vm272
    %v274 = vsel %vm273, %v266, %v270
    %v275 = vand.u32 2147483647, %v230
    %vm276 = vcmp.eq.f32.partialorder %v275, 8.507059e+37
    %v277 = vand.u32 %v230, 2147483648
    %v278 = vor.u32 1.1754944e-38, %v277
    %v279 = vsel %vm276, %v278, %v274
    %v280 = vmul.f32 1.0, %v279
    %v281 = vrcp.pop %v231
    %v282 = vmul.f32 %v231, %v281
    %v283 = vsub.f32 1.0, %v282
    %v284 = vmul.f32 %v281, %v283
    %v285 = vadd.f32 %v281, %v284
    %vm286 = vweird.f32 %v231
    %vm287 = vweird.f32 %v281
    %vm288 = vmor %vm286, %vm287
    %v289 = vsel %vm288, %v281, %v285
    %v290 = vand.u32 2147483647, %v231
    %vm291 = vcmp.eq.f32.partialorder %v290, 8.507059e+37
    %v292 = vand.u32 %v231, 2147483648
    %v293 = vor.u32 1.1754944e-38, %v292
    %v294 = vsel %vm291, %v293, %v289
    %v295 = vmul.f32 1.0, %v294
    %v296 = vrcp.pop %v232
    %v297 = vmul.f32 %v232, %v296
    %v298 = vsub.f32 1.0, %v297
    %v299 = vmul.f32 %v296, %v298
    %v300 = vadd.f32 %v296, %v299
    %vm301 = vweird.f32 %v232
    %vm302 = vweird.f32 %v296
    %vm303 = vmor %vm301, %vm302
    %v304 = vsel %vm303, %v296, %v300
    %v305 = vand.u32 2147483647, %v232
    %vm306 = vcmp.eq.f32.partialorder %v305, 8.507059e+37
    %v307 = vand.u32 %v232, 2147483648
    %v308 = vor.u32 1.1754944e-38, %v307
    %v309 = vsel %vm306, %v308, %v304
    %v310 = vmul.f32 1.0, %v309
    %v311 = vrcp.pop %v233
    %v312 = vmul.f32 %v233, %v311
    %v313 = vsub.f32 1.0, %v312
    %v314 = vmul.f32 %v311, %v313
    %v315 = vadd.f32 %v311, %v314
    %vm316 = vweird.f32 %v233
    %vm317 = vweird.f32 %v311
    %vm318 = vmor %vm316, %vm317
    %v319 = vsel %vm318, %v311, %v315
    %v320 = vand.u32 2147483647, %v233
    %vm321 = vcmp.eq.f32.partialorder %v320, 8.507059e+37
    %v322 = vand.u32 %v233, 2147483648
    %v323 = vor.u32 1.1754944e-38, %v322
    %v324 = vsel %vm321, %v323, %v319
    %v325 = vmul.f32 1.0, %v324
    %v326 = vrcp.pop %v234
    %v327 = vmul.f32 %v234, %v326
    %v328 = vsub.f32 1.0, %v327
    %v329 = vmul.f32 %v326, %v328
    %v330 = vadd.f32 %v326, %v329
    %vm331 = vweird.f32 %v234
    %vm332 = vweird.f32 %v326
    %vm333 = vmor %vm331, %vm332
    %v334 = vsel %vm333, %v326, %v330
    %v335 = vand.u32 2147483647, %v234
    %vm336 = vcmp.eq.f32.partialorder %v335, 8.507059e+37
    %v337 = vand.u32 %v234, 2147483648
    %v338 = vor.u32 1.1754944e-38, %v337
    %v339 = vsel %vm336, %v338, %v334
    %v340 = vmul.f32 1.0, %v339
    %v341 = vrcp.pop %v235
    %v342 = vmul.f32 %v235, %v341
    %v343 = vsub.f32 1.0, %v342
    %v344 = vmul.f32 %v341, %v343
    %v345 = vadd.f32 %v341, %v344
    %vm346 = vweird.f32 %v235
    %vm347 = vweird.f32 %v341
    %vm348 = vmor %vm346, %vm347
    %v349 = vsel %vm348, %v341, %v345
    %v350 = vand.u32 2147483647, %v235
    %vm351 = vcmp.eq.f32.partialorder %v350, 8.507059e+37
    %v352 = vand.u32 %v235, 2147483648
    %v353 = vor.u32 1.1754944e-38, %v352
    %v354 = vsel %vm351, %v353, %v349
    %v355 = vmul.f32 1.0, %v354
    %v356 = vmul.f32 %v47, %v250
    %v357 = vmul.f32 %v48, %v265
    %v358 = vmul.f32 %v49, %v280
    %v359 = vmul.f32 %v50, %v295
    %v360 = vmul.f32 %v51, %v310
    %v361 = vmul.f32 %v52, %v325
    %v362 = vmul.f32 %v53, %v340
    %v363 = vmul.f32 %v54, %v355
    %364 = vst [vmem:[#allocation5] sm:$0xff] %v356
    %365 = vst [vmem:[#allocation5 + $0x8] sm:$0xff] %v357
    %366 = vst [vmem:[#allocation5 + $0x10] sm:$0xff] %v358
    %367 = vst [vmem:[#allocation5 + $0x18] sm:$0xff] %v359
    %368 = vst [vmem:[#allocation5 + $0x20] sm:$0xff] %v360
    %369 = vst [vmem:[#allocation5 + $0x28] sm:$0xff] %v361
    %370 = vst [vmem:[#allocation5 + $0x30] sm:$0xff] %v362
    %371 = vst [vmem:[#allocation5 + $0x38] sm:$0xff] %v363
    %s372 = scalar_lea.vmem [#allocation2], 64
    %v373 = vld [vmem:[%s372] sm:$0xff]
    %v374 = vld [vmem:[%s372 + $0x8] sm:$0xff]
    %v375 = vld [vmem:[%s372 + $0x10] sm:$0xff]
    %v376 = vld [vmem:[%s372 + $0x18] sm:$0xff]
    %v377 = vld [vmem:[%s372 + $0x20] sm:$0xff]
    %v378 = vld [vmem:[%s372 + $0x28] sm:$0xff]
    %v379 = vld [vmem:[%s372 + $0x30] sm:$0xff]
    %v380 = vld [vmem:[%s372 + $0x38] sm:$0xff]
    %381 = vmatpush.msra.mxu0 0.0
    %382 = vmatpush.msra.mxu0 0.0
    %383 = vmatpush.msra.mxu0 0.0
    %384 = vmatpush.msra.mxu0 0.0
    %385 = vmatpush.msra.mxu0 0.0
    %386 = vmatpush.msra.mxu0 0.0
    %387 = vmatpush.msra.mxu0 0.0
    %388 = vmatpush.msra.mxu0 0.0
    %389 = vmatpush.msra.mxu0 0.0
    %390 = vmatpush.msra.mxu0 0.0
    %391 = vmatpush.msra.mxu0 0.0
    %392 = vmatpush.msra.mxu0 0.0
    %393 = vmatpush.msra.mxu0 %v379
    %394 = vmatpush.msra.mxu0 %v377
    %395 = vmatpush.msra.mxu0 %v375
    %396 = vmatpush.msra.mxu0 %v373
    %397 = vmatmul.f32.gmra.mxu0 %v62
    %v398 = vpop.f32.mrf.mxu0
    %v399 = vadd.f32 %v58, %v398
    %400 = vdwg.mxu0
    %401 = vmatpush.msra.mxu0 0.0
    %402 = vmatpush.msra.mxu0 0.0
    %403 = vmatpush.msra.mxu0 0.0
    %404 = vmatpush.msra.mxu0 0.0
    %405 = vmatpush.msra.mxu0 0.0
    %406 = vmatpush.msra.mxu0 0.0
    %407 = vmatpush.msra.mxu0 0.0
    %408 = vmatpush.msra.mxu0 0.0
    %409 = vmatpush.msra.mxu0 0.0
    %410 = vmatpush.msra.mxu0 0.0
    %411 = vmatpush.msra.mxu0 0.0
    %412 = vmatpush.msra.mxu0 0.0
    %413 = vmatpush.msra.mxu0 %v380
    %414 = vmatpush.msra.mxu0 %v378
    %415 = vmatpush.msra.mxu0 %v376
    %416 = vmatpush.msra.mxu0 %v374
    %417 = vmatmul.f32.gmra.mxu0 %v62
    %v418 = vpop.f32.mrf.mxu0
    %v419 = vadd.f32 %v58, %v418
    %420 = vdwg.mxu0
    %v421 = vmax.f32 %v399, 0.0
    %v422 = vmax.f32 %v419, 0.0
    %v424 = vsel %vm139, %v421, 0
    %v427 = vsel %vm139, %v422, 0
    %429 = vmatpush.msra.mxu0 0.0
    %430 = vmatpush.msra.mxu0 0.0
    %431 = vmatpush.msra.mxu0 0.0
    %432 = vmatpush.msra.mxu0 0.0
    %433 = vmatpush.msra.mxu0 0.0
    %434 = vmatpush.msra.mxu0 0.0
    %435 = vmatpush.msra.mxu0 0.0
    %436 = vmatpush.msra.mxu0 0.0
    %437 = vmatpush.msra.mxu0 0.0
    %438 = vmatpush.msra.mxu0 0.0
    %439 = vmatpush.msra.mxu0 0.0
    %440 = vmatpush.msra.mxu0 0.0
    %441 = vmatpush.msra.mxu0 0.0
    %442 = vmatpush.msra.mxu0 0.0
    %443 = vmatpush.msra.mxu0 0.0
    %444 = vmatpush.msra.mxu0 %v424
    %445 = vmatmul.f32.gmra.mxu0 %v128
    %v446 = vpop.f32.mrf.mxu0
    %v447 = vadd.f32 %v109, %v446
    %448 = vmatmul.f32.gmra.mxu0 %v131
    %v449 = vpop.f32.mrf.mxu0
    %v450 = vadd.f32 %v114, %v449
    %451 = vmatmul.f32.gmra.mxu0 %v134
    %v452 = vpop.f32.mrf.mxu0
    %v453 = vadd.f32 %v119, %v452
    %454 = vmatmul.f32.gmra.mxu0 %v137
    %v455 = vpop.f32.mrf.mxu0
    %v456 = vadd.f32 %v124, %v455
    %457 = vdwg.mxu0
    %458 = vmatpush.msra.mxu0 0.0
    %459 = vmatpush.msra.mxu0 0.0
    %460 = vmatpush.msra.mxu0 0.0
    %461 = vmatpush.msra.mxu0 0.0
    %462 = vmatpush.msra.mxu0 0.0
    %463 = vmatpush.msra.mxu0 0.0
    %464 = vmatpush.msra.mxu0 0.0
    %465 = vmatpush.msra.mxu0 0.0
    %466 = vmatpush.msra.mxu0 0.0
    %467 = vmatpush.msra.mxu0 0.0
    %468 = vmatpush.msra.mxu0 0.0
    %469 = vmatpush.msra.mxu0 0.0
    %470 = vmatpush.msra.mxu0 0.0
    %471 = vmatpush.msra.mxu0 0.0
    %472 = vmatpush.msra.mxu0 0.0
    %473 = vmatpush.msra.mxu0 %v427
    %474 = vmatmul.f32.gmra.mxu0 %v128
    %v475 = vpop.f32.mrf.mxu0
    %v476 = vadd.f32 %v109, %v475
    %477 = vmatmul.f32.gmra.mxu0 %v131
    %v478 = vpop.f32.mrf.mxu0
    %v479 = vadd.f32 %v114, %v478
    %480 = vmatmul.f32.gmra.mxu0 %v134
    %v481 = vpop.f32.mrf.mxu0
    %v482 = vadd.f32 %v119, %v481
    %483 = vmatmul.f32.gmra.mxu0 %v137
    %v484 = vpop.f32.mrf.mxu0
    %v485 = vadd.f32 %v124, %v484
    %486 = vdwg.mxu0
    %v487 = vxor.u32 %v447, 2147483648
    %v488 = vxor.u32 %v476, 2147483648
    %v489 = vxor.u32 %v450, 2147483648
    %v490 = vxor.u32 %v479, 2147483648
    %v491 = vxor.u32 %v453, 2147483648
    %v492 = vxor.u32 %v482, 2147483648
    %v493 = vxor.u32 %v456, 2147483648
    %v494 = vxor.u32 %v485, 2147483648
    %v495 = vmul.f32 %v487, 1.442695
    %v496 = vpow.pop %v495
    %v497 = vmul.f32 %v488, 1.442695
    %v498 = vpow.pop %v497
    %v499 = vmul.f32 %v489, 1.442695
    %v500 = vpow.pop %v499
    %v501 = vmul.f32 %v490, 1.442695
    %v502 = vpow.pop %v501
    %v503 = vmul.f32 %v491, 1.442695
    %v504 = vpow.pop %v503
    %v505 = vmul.f32 %v492, 1.442695
    %v506 = vpow.pop %v505
    %v507 = vmul.f32 %v493, 1.442695
    %v508 = vpow.pop %v507
    %v509 = vmul.f32 %v494, 1.442695
    %v510 = vpow.pop %v509
    %v511 = vadd.f32 %v496, 1.0
    %v512 = vadd.f32 %v498, 1.0
    %v513 = vadd.f32 %v500, 1.0
    %v514 = vadd.f32 %v502, 1.0
    %v515 = vadd.f32 %v504, 1.0
    %v516 = vadd.f32 %v506, 1.0
    %v517 = vadd.f32 %v508, 1.0
    %v518 = vadd.f32 %v510, 1.0
    %v519 = vrcp.pop %v511
    %v520 = vmul.f32 %v511, %v519
    %v521 = vsub.f32 1.0, %v520
    %v522 = vmul.f32 %v519, %v521
    %v523 = vadd.f32 %v519, %v522
    %vm524 = vweird.f32 %v511
    %vm525 = vweird.f32 %v519
    %vm526 = vmor %vm524, %vm525
    %v527 = vsel %vm526, %v519, %v523
    %v528 = vand.u32 2147483647, %v511
    %vm529 = vcmp.eq.f32.partialorder %v528, 8.507059e+37
    %v530 = vand.u32 %v511, 2147483648
    %v531 = vor.u32 1.1754944e-38, %v530
    %v532 = vsel %vm529, %v531, %v527
    %v533 = vmul.f32 1.0, %v532
    %v534 = vrcp.pop %v512
    %v535 = vmul.f32 %v512, %v534
    %v536 = vsub.f32 1.0, %v535
    %v537 = vmul.f32 %v534, %v536
    %v538 = vadd.f32 %v534, %v537
    %vm539 = vweird.f32 %v512
    %vm540 = vweird.f32 %v534
    %vm541 = vmor %vm539, %vm540
    %v542 = vsel %vm541, %v534, %v538
    %v543 = vand.u32 2147483647, %v512
    %vm544 = vcmp.eq.f32.partialorder %v543, 8.507059e+37
    %v545 = vand.u32 %v512, 2147483648
    %v546 = vor.u32 1.1754944e-38, %v545
    %v547 = vsel %vm544, %v546, %v542
    %v548 = vmul.f32 1.0, %v547
    %v549 = vrcp.pop %v513
    %v550 = vmul.f32 %v513, %v549
    %v551 = vsub.f32 1.0, %v550
    %v552 = vmul.f32 %v549, %v551
    %v553 = vadd.f32 %v549, %v552
    %vm554 = vweird.f32 %v513
    %vm555 = vweird.f32 %v549
    %vm556 = vmor %vm554, %vm555
    %v557 = vsel %vm556, %v549, %v553
    %v558 = vand.u32 2147483647, %v513
    %vm559 = vcmp.eq.f32.partialorder %v558, 8.507059e+37
    %v560 = vand.u32 %v513, 2147483648
    %v561 = vor.u32 1.1754944e-38, %v560
    %v562 = vsel %vm559, %v561, %v557
    %v563 = vmul.f32 1.0, %v562
    %v564 = vrcp.pop %v514
    %v565 = vmul.f32 %v514, %v564
    %v566 = vsub.f32 1.0, %v565
    %v567 = vmul.f32 %v564, %v566
    %v568 = vadd.f32 %v564, %v567
    %vm569 = vweird.f32 %v514
    %vm570 = vweird.f32 %v564
    %vm571 = vmor %vm569, %vm570
    %v572 = vsel %vm571, %v564, %v568
    %v573 = vand.u32 2147483647, %v514
    %vm574 = vcmp.eq.f32.partialorder %v573, 8.507059e+37
    %v575 = vand.u32 %v514, 2147483648
    %v576 = vor.u32 1.1754944e-38, %v575
    %v577 = vsel %vm574, %v576, %v572
    %v578 = vmul.f32 1.0, %v577
    %v579 = vrcp.pop %v515
    %v580 = vmul.f32 %v515, %v579
    %v581 = vsub.f32 1.0, %v580
    %v582 = vmul.f32 %v579, %v581
    %v583 = vadd.f32 %v579, %v582
    %vm584 = vweird.f32 %v515
    %vm585 = vweird.f32 %v579
    %vm586 = vmor %vm584, %vm585
    %v587 = vsel %vm586, %v579, %v583
    %v588 = vand.u32 2147483647, %v515
    %vm589 = vcmp.eq.f32.partialorder %v588, 8.507059e+37
    %v590 = vand.u32 %v515, 2147483648
    %v591 = vor.u32 1.1754944e-38, %v590
    %v592 = vsel %vm589, %v591, %v587
    %v593 = vmul.f32 1.0, %v592
    %v594 = vrcp.pop %v516
    %v595 = vmul.f32 %v516, %v594
    %v596 = vsub.f32 1.0, %v595
    %v597 = vmul.f32 %v594, %v596
    %v598 = vadd.f32 %v594, %v597
    %vm599 = vweird.f32 %v516
    %vm600 = vweird.f32 %v594
    %vm601 = vmor %vm599, %vm600
    %v602 = vsel %vm601, %v594, %v598
    %v603 = vand.u32 2147483647, %v516
    %vm604 = vcmp.eq.f32.partialorder %v603, 8.507059e+37
    %v605 = vand.u32 %v516, 2147483648
    %v606 = vor.u32 1.1754944e-38, %v605
    %v607 = vsel %vm604, %v606, %v602
    %v608 = vmul.f32 1.0, %v607
    %v609 = vrcp.pop %v517
    %v610 = vmul.f32 %v517, %v609
    %v611 = vsub.f32 1.0, %v610
    %v612 = vmul.f32 %v609, %v611
    %v613 = vadd.f32 %v609, %v612
    %vm614 = vweird.f32 %v517
    %vm615 = vweird.f32 %v609
    %vm616 = vmor %vm614, %vm615
    %v617 = vsel %vm616, %v609, %v613
    %v618 = vand.u32 2147483647, %v517
    %vm619 = vcmp.eq.f32.partialorder %v618, 8.507059e+37
    %v620 = vand.u32 %v517, 2147483648
    %v621 = vor.u32 1.1754944e-38, %v620
    %v622 = vsel %vm619, %v621, %v617
    %v623 = vmul.f32 1.0, %v622
    %v624 = vrcp.pop %v518
    %v625 = vmul.f32 %v518, %v624
    %v626 = vsub.f32 1.0, %v625
    %v627 = vmul.f32 %v624, %v626
    %v628 = vadd.f32 %v624, %v627
    %vm629 = vweird.f32 %v518
    %vm630 = vweird.f32 %v624
    %vm631 = vmor %vm629, %vm630
    %v632 = vsel %vm631, %v624, %v628
    %v633 = vand.u32 2147483647, %v518
    %vm634 = vcmp.eq.f32.partialorder %v633, 8.507059e+37
    %v635 = vand.u32 %v518, 2147483648
    %v636 = vor.u32 1.1754944e-38, %v635
    %v637 = vsel %vm634, %v636, %v632
    %v638 = vmul.f32 1.0, %v637
    %v639 = vmul.f32 %v373, %v533
    %v640 = vmul.f32 %v374, %v548
    %v641 = vmul.f32 %v375, %v563
    %v642 = vmul.f32 %v376, %v578
    %v643 = vmul.f32 %v377, %v593
    %v644 = vmul.f32 %v378, %v608
    %v645 = vmul.f32 %v379, %v623
    %v646 = vmul.f32 %v380, %v638
    %s647 = scalar_lea.vmem [#allocation5], 64
    %648 = vst [vmem:[%s647] sm:$0xff] %v639
    %649 = vst [vmem:[%s647 + $0x8] sm:$0xff] %v640
    %650 = vst [vmem:[%s647 + $0x10] sm:$0xff] %v641
    %651 = vst [vmem:[%s647 + $0x18] sm:$0xff] %v642
    %652 = vst [vmem:[%s647 + $0x20] sm:$0xff] %v643
    %653 = vst [vmem:[%s647 + $0x28] sm:$0xff] %v644
    %654 = vst [vmem:[%s647 + $0x30] sm:$0xff] %v645
    %655 = vst [vmem:[%s647 + $0x38] sm:$0xff] %v646
    // Predicated region
    $region26: #{_attention_block_call.1} parent=1 // pred_check
      _
    $region27: #{_attention_block_call.1} parent=1 // pred_check_branch
      %657 = sbr.rel (0) target = $region29
    $region28: #{_attention_block_call.1} parent=1 // pred_region
      %659 = vsyncadd [#allocation4], 0
      %s660 = sshll.u32 [#allocation5], 4
      %s661 = int_to_ptr.vmem [resolvable:$true] %s660
      %s662 = sshll.u32 %s5, 4
      %s663 = int_to_ptr.hbm [resolvable:$true] %s662
      %668 = dma.vmem_to_hbm [thread:$0]  %s661, 2048, %s663, [#allocation4], 256, 256, 16
    $region29: #{_attention_block_call.1} parent=1 // pred_fallthru
      _
    // Predicated region
    $region30: #{_attention_block_call.1} parent=1 // pred_check
      _
    $region31: #{_attention_block_call.1} parent=1 // pred_check_branch
      %670 = sbr.rel (0) target = $region33
    $region32: #{_attention_block_call.1} parent=1 // pred_region
      %672 = dma.done [#allocation4], 2048
    $region33: #{_attention_block_call.1} parent=1 // pred_fallthru
      _
    %673 = vsyncpa [#allocation3], 1
    %674 = vsyncpa [#allocation4], 1

</llo_original>
